<compile_context>
chip_gen: v6e
topology: v6e:2x2x1
jax: 0.10.0
libtpu: 0.0.40
codegen_flags: <defaults>
</compile_context>

<pallas_src>
import functools

import jax
import jax.numpy as jnp
from jax.experimental import pallas as pl
from jax.experimental.pallas import tpu as pltpu


def embedding_gather_kernel(ids_ref, table_hbm, out_ref, gather_buf, sem):
    # ids_ref:    (N_padded,) int32 in SMEM (scalar prefetch)
    # table_hbm:  (V, D) raw HBM ref (memory_space=pl.ANY)
    # out_ref:    (TB, D) VMEM output tile
    # gather_buf: (TB, D) VMEM scratch the row DMAs land in
    # sem:        single DMA semaphore shared by all TB row copies
    i = pl.program_id(0)
    tb, _ = gather_buf.shape
    v = table_hbm.shape[0]
    base = i * tb

    # Issue all TB row-gather DMAs so they are in flight concurrently.
    copies = []
    for t in range(tb):
        row = ids_ref[base + t]
        # Guard against out-of-range ids (PyTorch nn.Embedding would error).
        row = jnp.minimum(jnp.maximum(row, 0), v - 1)
        cp = pltpu.make_async_copy(
            table_hbm.at[pl.ds(row, 1), :],
            gather_buf.at[pl.ds(t, 1), :],
            sem,
        )
        cp.start()
        copies.append(cp)

    # Wait for every row (all copies are the same size, order irrelevant).
    for cp in copies:
        cp.wait()

    # Lane-dense (TB, D) store; the pipeline writes this block back to HBM.
    out_ref[...] = gather_buf[...]


def _round_up(x: int, m: int) -> int:
    return (x + m - 1) // m * m


def token_embedding(token_ids, table, *, tb: int = 128):
    """token_ids: (B, S) int  ->  (B, S, D) embedding lookup (gather)."""
    B, S = token_ids.shape
    V, D = table.shape
    N = B * S

    # Block size: multiple of 8 (sublane), no larger than the padded token count.
    tb = max(8, min(_round_up(tb, 8), _round_up(N, 8)))

    ids_flat = token_ids.reshape(N).astype(jnp.int32)
    n_total = _round_up(N, tb)
    if n_total != N:
        ids_flat = jnp.concatenate(
            [ids_flat, jnp.zeros((n_total - N,), jnp.int32)]
        )

    itemsize = int(jnp.dtype(table.dtype).itemsize)
    kernel = pl.pallas_call(
        embedding_gather_kernel,
        out_shape=jax.ShapeDtypeStruct((n_total, D), table.dtype),
        grid_spec=pltpu.PrefetchScalarGridSpec(
            num_scalar_prefetch=1,                       # ids -> SMEM
            grid=(n_total // tb,),
            in_specs=[
                pl.BlockSpec(memory_space=pl.ANY),       # table stays in HBM
            ],
            out_specs=pl.BlockSpec((tb, D), lambda i, ids: (i, 0)),
            scratch_shapes=[
                pltpu.VMEM((tb, D), table.dtype),        # gather landing buffer
                pltpu.SemaphoreType.DMA(()),             # one shared DMA sem
            ],
        ),
        compiler_params=pltpu.CompilerParams(
            dimension_semantics=("parallel",),           # v7x: shard over 2 TCs
        ),
        cost_estimate=pl.CostEstimate(
            flops=0,
            transcendentals=0,
            bytes_accessed=int(2 * n_total * D * itemsize + n_total * 4),
        ),
    )
    out_flat = kernel(ids_flat, table)
    return out_flat[:N].reshape(B, S, D)


if __name__ == "__main__":
    vocab_size = 1000
    embedding_dim = 128     # nn.Embedding default in the spec
    batch, seq = 2, 8

    key = jax.random.PRNGKey(0)
    k_table, k_ids = jax.random.split(key)

    # nn.Embedding default init: weight ~ N(0, 1)
    table = jax.random.normal(
        k_table, (vocab_size, embedding_dim), dtype=jnp.float32
    )
    token_ids = jax.random.randint(
        k_ids, (batch, seq), 0, vocab_size, dtype=jnp.int32
    )

    out = token_embedding(token_ids, table)
    out = jax.block_until_ready(out)

    # sanity-check against plain JAX gather
    ref = jnp.take(table, token_ids, axis=0)
    assert out.shape == (batch, seq, embedding_dim)
    assert jnp.allclose(out, ref, atol=1e-6), "mismatch vs reference gather"

    print("KERNEL_OK")
</pallas_src>

<mosaic_0001>
module attributes {stable_mosaic.version = 11 : i64} {
  func.func @embedding_gather_kernel(%arg0: i32, %arg1: memref<16xi32, #tpu.memory_space<smem>>, %arg2: memref<1000x128xf32, #tpu.memory_space<any>>, %arg3: memref<16x128xf32, #tpu.memory_space<vmem>>, %arg4: memref<16x128xf32, #tpu.memory_space<vmem>>, %arg5: memref<!tpu.dma_semaphore, #tpu.memory_space<semaphore_mem>>) attributes {dimension_semantics = [#tpu.dimension_semantics<parallel>], iteration_bounds = array<i64: 1>, scalar_prefetch = 1 : i64, scratch_operands = 2 : i64, tpu.core_type = #tpu.core_type<tc>, window_params = [{}, {transform_indices = @transform_1, window_bounds = array<i64: 16, 128>}]} {
    %c16_i32 = arith.constant 16 : i32
    %0 = arith.muli %arg0, %c16_i32 : i32
    %c0_i32 = arith.constant 0 : i32
    %1 = arith.addi %0, %c0_i32 : i32
    %2 = arith.index_cast %1 : i32 to index
    %3 = memref.load %arg1[%2] : memref<16xi32, #tpu.memory_space<smem>>
    %c0_i32_0 = arith.constant 0 : i32
    %4 = arith.maxsi %3, %c0_i32_0 : i32
    %c999_i32 = arith.constant 999 : i32
    %5 = arith.minsi %4, %c999_i32 : i32
    %c0_i32_1 = arith.constant 0 : i32
    %6 = tpu.memref_slice %arg2[%5, %c0_i32_1] : memref<1000x128xf32, #tpu.memory_space<any>> -> memref<1x128xf32, #tpu.memory_space<any>>
    %c0_i32_2 = arith.constant 0 : i32
    %c0_i32_3 = arith.constant 0 : i32
    %7 = tpu.memref_slice %arg4[%c0_i32_2, %c0_i32_3] : memref<16x128xf32, #tpu.memory_space<vmem>> -> memref<1x128xf32, #tpu.memory_space<vmem>>
    tpu.enqueue_dma source(%6 : memref<1x128xf32, #tpu.memory_space<any>>) target(%7 : memref<1x128xf32, #tpu.memory_space<vmem>>) target_semaphore(%arg5 : memref<!tpu.dma_semaphore, #tpu.memory_space<semaphore_mem>>)
    %c1_i32 = arith.constant 1 : i32
    %8 = arith.addi %0, %c1_i32 : i32
    %9 = arith.index_cast %8 : i32 to index
    %10 = memref.load %arg1[%9] : memref<16xi32, #tpu.memory_space<smem>>
    %c0_i32_4 = arith.constant 0 : i32
    %11 = arith.maxsi %10, %c0_i32_4 : i32
    %c999_i32_5 = arith.constant 999 : i32
    %12 = arith.minsi %11, %c999_i32_5 : i32
    %c0_i32_6 = arith.constant 0 : i32
    %13 = tpu.memref_slice %arg2[%12, %c0_i32_6] : memref<1000x128xf32, #tpu.memory_space<any>> -> memref<1x128xf32, #tpu.memory_space<any>>
    %c1_i32_7 = arith.constant 1 : i32
    %c0_i32_8 = arith.constant 0 : i32
    %14 = tpu.memref_slice %arg4[%c1_i32_7, %c0_i32_8] : memref<16x128xf32, #tpu.memory_space<vmem>> -> memref<1x128xf32, #tpu.memory_space<vmem>>
    tpu.enqueue_dma source(%13 : memref<1x128xf32, #tpu.memory_space<any>>) target(%14 : memref<1x128xf32, #tpu.memory_space<vmem>>) target_semaphore(%arg5 : memref<!tpu.dma_semaphore, #tpu.memory_space<semaphore_mem>>)
    %c2_i32 = arith.constant 2 : i32
    %15 = arith.addi %0, %c2_i32 : i32
    %16 = arith.index_cast %15 : i32 to index
    %17 = memref.load %arg1[%16] : memref<16xi32, #tpu.memory_space<smem>>
    %c0_i32_9 = arith.constant 0 : i32
    %18 = arith.maxsi %17, %c0_i32_9 : i32
    %c999_i32_10 = arith.constant 999 : i32
    %19 = arith.minsi %18, %c999_i32_10 : i32
    %c0_i32_11 = arith.constant 0 : i32
    %20 = tpu.memref_slice %arg2[%19, %c0_i32_11] : memref<1000x128xf32, #tpu.memory_space<any>> -> memref<1x128xf32, #tpu.memory_space<any>>
    %c2_i32_12 = arith.constant 2 : i32
    %c0_i32_13 = arith.constant 0 : i32
    %21 = tpu.memref_slice %arg4[%c2_i32_12, %c0_i32_13] : memref<16x128xf32, #tpu.memory_space<vmem>> -> memref<1x128xf32, #tpu.memory_space<vmem>>
    tpu.enqueue_dma source(%20 : memref<1x128xf32, #tpu.memory_space<any>>) target(%21 : memref<1x128xf32, #tpu.memory_space<vmem>>) target_semaphore(%arg5 : memref<!tpu.dma_semaphore, #tpu.memory_space<semaphore_mem>>)
    %c3_i32 = arith.constant 3 : i32
    %22 = arith.addi %0, %c3_i32 : i32
    %23 = arith.index_cast %22 : i32 to index
    %24 = memref.load %arg1[%23] : memref<16xi32, #tpu.memory_space<smem>>
    %c0_i32_14 = arith.constant 0 : i32
    %25 = arith.maxsi %24, %c0_i32_14 : i32
    %c999_i32_15 = arith.constant 999 : i32
    %26 = arith.minsi %25, %c999_i32_15 : i32
    %c0_i32_16 = arith.constant 0 : i32
    %27 = tpu.memref_slice %arg2[%26, %c0_i32_16] : memref<1000x128xf32, #tpu.memory_space<any>> -> memref<1x128xf32, #tpu.memory_space<any>>
    %c3_i32_17 = arith.constant 3 : i32
    %c0_i32_18 = arith.constant 0 : i32
    %28 = tpu.memref_slice %arg4[%c3_i32_17, %c0_i32_18] : memref<16x128xf32, #tpu.memory_space<vmem>> -> memref<1x128xf32, #tpu.memory_space<vmem>>
    tpu.enqueue_dma source(%27 : memref<1x128xf32, #tpu.memory_space<any>>) target(%28 : memref<1x128xf32, #tpu.memory_space<vmem>>) target_semaphore(%arg5 : memref<!tpu.dma_semaphore, #tpu.memory_space<semaphore_mem>>)
    %c4_i32 = arith.constant 4 : i32
    %29 = arith.addi %0, %c4_i32 : i32
    %30 = arith.index_cast %29 : i32 to index
    %31 = memref.load %arg1[%30] : memref<16xi32, #tpu.memory_space<smem>>
    %c0_i32_19 = arith.constant 0 : i32
    %32 = arith.maxsi %31, %c0_i32_19 : i32
    %c999_i32_20 = arith.constant 999 : i32
    %33 = arith.minsi %32, %c999_i32_20 : i32
    %c0_i32_21 = arith.constant 0 : i32
    %34 = tpu.memref_slice %arg2[%33, %c0_i32_21] : memref<1000x128xf32, #tpu.memory_space<any>> -> memref<1x128xf32, #tpu.memory_space<any>>
    %c4_i32_22 = arith.constant 4 : i32
    %c0_i32_23 = arith.constant 0 : i32
    %35 = tpu.memref_slice %arg4[%c4_i32_22, %c0_i32_23] : memref<16x128xf32, #tpu.memory_space<vmem>> -> memref<1x128xf32, #tpu.memory_space<vmem>>
    tpu.enqueue_dma source(%34 : memref<1x128xf32, #tpu.memory_space<any>>) target(%35 : memref<1x128xf32, #tpu.memory_space<vmem>>) target_semaphore(%arg5 : memref<!tpu.dma_semaphore, #tpu.memory_space<semaphore_mem>>)
    %c5_i32 = arith.constant 5 : i32
    %36 = arith.addi %0, %c5_i32 : i32
    %37 = arith.index_cast %36 : i32 to index
    %38 = memref.load %arg1[%37] : memref<16xi32, #tpu.memory_space<smem>>
    %c0_i32_24 = arith.constant 0 : i32
    %39 = arith.maxsi %38, %c0_i32_24 : i32
    %c999_i32_25 = arith.constant 999 : i32
    %40 = arith.minsi %39, %c999_i32_25 : i32
    %c0_i32_26 = arith.constant 0 : i32
    %41 = tpu.memref_slice %arg2[%40, %c0_i32_26] : memref<1000x128xf32, #tpu.memory_space<any>> -> memref<1x128xf32, #tpu.memory_space<any>>
    %c5_i32_27 = arith.constant 5 : i32
    %c0_i32_28 = arith.constant 0 : i32
    %42 = tpu.memref_slice %arg4[%c5_i32_27, %c0_i32_28] : memref<16x128xf32, #tpu.memory_space<vmem>> -> memref<1x128xf32, #tpu.memory_space<vmem>>
    tpu.enqueue_dma source(%41 : memref<1x128xf32, #tpu.memory_space<any>>) target(%42 : memref<1x128xf32, #tpu.memory_space<vmem>>) target_semaphore(%arg5 : memref<!tpu.dma_semaphore, #tpu.memory_space<semaphore_mem>>)
    %c6_i32 = arith.constant 6 : i32
    %43 = arith.addi %0, %c6_i32 : i32
    %44 = arith.index_cast %43 : i32 to index
    %45 = memref.load %arg1[%44] : memref<16xi32, #tpu.memory_space<smem>>
    %c0_i32_29 = arith.constant 0 : i32
    %46 = arith.maxsi %45, %c0_i32_29 : i32
    %c999_i32_30 = arith.constant 999 : i32
    %47 = arith.minsi %46, %c999_i32_30 : i32
    %c0_i32_31 = arith.constant 0 : i32
    %48 = tpu.memref_slice %arg2[%47, %c0_i32_31] : memref<1000x128xf32, #tpu.memory_space<any>> -> memref<1x128xf32, #tpu.memory_space<any>>
    %c6_i32_32 = arith.constant 6 : i32
    %c0_i32_33 = arith.constant 0 : i32
    %49 = tpu.memref_slice %arg4[%c6_i32_32, %c0_i32_33] : memref<16x128xf32, #tpu.memory_space<vmem>> -> memref<1x128xf32, #tpu.memory_space<vmem>>
    tpu.enqueue_dma source(%48 : memref<1x128xf32, #tpu.memory_space<any>>) target(%49 : memref<1x128xf32, #tpu.memory_space<vmem>>) target_semaphore(%arg5 : memref<!tpu.dma_semaphore, #tpu.memory_space<semaphore_mem>>)
    %c7_i32 = arith.constant 7 : i32
    %50 = arith.addi %0, %c7_i32 : i32
    %51 = arith.index_cast %50 : i32 to index
    %52 = memref.load %arg1[%51] : memref<16xi32, #tpu.memory_space<smem>>
    %c0_i32_34 = arith.constant 0 : i32
    %53 = arith.maxsi %52, %c0_i32_34 : i32
    %c999_i32_35 = arith.constant 999 : i32
    %54 = arith.minsi %53, %c999_i32_35 : i32
    %c0_i32_36 = arith.constant 0 : i32
    %55 = tpu.memref_slice %arg2[%54, %c0_i32_36] : memref<1000x128xf32, #tpu.memory_space<any>> -> memref<1x128xf32, #tpu.memory_space<any>>
    %c7_i32_37 = arith.constant 7 : i32
    %c0_i32_38 = arith.constant 0 : i32
    %56 = tpu.memref_slice %arg4[%c7_i32_37, %c0_i32_38] : memref<16x128xf32, #tpu.memory_space<vmem>> -> memref<1x128xf32, #tpu.memory_space<vmem>>
    tpu.enqueue_dma source(%55 : memref<1x128xf32, #tpu.memory_space<any>>) target(%56 : memref<1x128xf32, #tpu.memory_space<vmem>>) target_semaphore(%arg5 : memref<!tpu.dma_semaphore, #tpu.memory_space<semaphore_mem>>)
    %c8_i32 = arith.constant 8 : i32
    %57 = arith.addi %0, %c8_i32 : i32
    %58 = arith.index_cast %57 : i32 to index
    %59 = memref.load %arg1[%58] : memref<16xi32, #tpu.memory_space<smem>>
    %c0_i32_39 = arith.constant 0 : i32
    %60 = arith.maxsi %59, %c0_i32_39 : i32
    %c999_i32_40 = arith.constant 999 : i32
    %61 = arith.minsi %60, %c999_i32_40 : i32
    %c0_i32_41 = arith.constant 0 : i32
    %62 = tpu.memref_slice %arg2[%61, %c0_i32_41] : memref<1000x128xf32, #tpu.memory_space<any>> -> memref<1x128xf32, #tpu.memory_space<any>>
    %c8_i32_42 = arith.constant 8 : i32
    %c0_i32_43 = arith.constant 0 : i32
    %63 = tpu.memref_slice %arg4[%c8_i32_42, %c0_i32_43] : memref<16x128xf32, #tpu.memory_space<vmem>> -> memref<1x128xf32, #tpu.memory_space<vmem>>
    tpu.enqueue_dma source(%62 : memref<1x128xf32, #tpu.memory_space<any>>) target(%63 : memref<1x128xf32, #tpu.memory_space<vmem>>) target_semaphore(%arg5 : memref<!tpu.dma_semaphore, #tpu.memory_space<semaphore_mem>>)
    %c9_i32 = arith.constant 9 : i32
    %64 = arith.addi %0, %c9_i32 : i32
    %65 = arith.index_cast %64 : i32 to index
    %66 = memref.load %arg1[%65] : memref<16xi32, #tpu.memory_space<smem>>
    %c0_i32_44 = arith.constant 0 : i32
    %67 = arith.maxsi %66, %c0_i32_44 : i32
    %c999_i32_45 = arith.constant 999 : i32
    %68 = arith.minsi %67, %c999_i32_45 : i32
    %c0_i32_46 = arith.constant 0 : i32
    %69 = tpu.memref_slice %arg2[%68, %c0_i32_46] : memref<1000x128xf32, #tpu.memory_space<any>> -> memref<1x128xf32, #tpu.memory_space<any>>
    %c9_i32_47 = arith.constant 9 : i32
    %c0_i32_48 = arith.constant 0 : i32
    %70 = tpu.memref_slice %arg4[%c9_i32_47, %c0_i32_48] : memref<16x128xf32, #tpu.memory_space<vmem>> -> memref<1x128xf32, #tpu.memory_space<vmem>>
    tpu.enqueue_dma source(%69 : memref<1x128xf32, #tpu.memory_space<any>>) target(%70 : memref<1x128xf32, #tpu.memory_space<vmem>>) target_semaphore(%arg5 : memref<!tpu.dma_semaphore, #tpu.memory_space<semaphore_mem>>)
    %c10_i32 = arith.constant 10 : i32
    %71 = arith.addi %0, %c10_i32 : i32
    %72 = arith.index_cast %71 : i32 to index
    %73 = memref.load %arg1[%72] : memref<16xi32, #tpu.memory_space<smem>>
    %c0_i32_49 = arith.constant 0 : i32
    %74 = arith.maxsi %73, %c0_i32_49 : i32
    %c999_i32_50 = arith.constant 999 : i32
    %75 = arith.minsi %74, %c999_i32_50 : i32
    %c0_i32_51 = arith.constant 0 : i32
    %76 = tpu.memref_slice %arg2[%75, %c0_i32_51] : memref<1000x128xf32, #tpu.memory_space<any>> -> memref<1x128xf32, #tpu.memory_space<any>>
    %c10_i32_52 = arith.constant 10 : i32
    %c0_i32_53 = arith.constant 0 : i32
    %77 = tpu.memref_slice %arg4[%c10_i32_52, %c0_i32_53] : memref<16x128xf32, #tpu.memory_space<vmem>> -> memref<1x128xf32, #tpu.memory_space<vmem>>
    tpu.enqueue_dma source(%76 : memref<1x128xf32, #tpu.memory_space<any>>) target(%77 : memref<1x128xf32, #tpu.memory_space<vmem>>) target_semaphore(%arg5 : memref<!tpu.dma_semaphore, #tpu.memory_space<semaphore_mem>>)
    %c11_i32 = arith.constant 11 : i32
    %78 = arith.addi %0, %c11_i32 : i32
    %79 = arith.index_cast %78 : i32 to index
    %80 = memref.load %arg1[%79] : memref<16xi32, #tpu.memory_space<smem>>
    %c0_i32_54 = arith.constant 0 : i32
    %81 = arith.maxsi %80, %c0_i32_54 : i32
    %c999_i32_55 = arith.constant 999 : i32
    %82 = arith.minsi %81, %c999_i32_55 : i32
    %c0_i32_56 = arith.constant 0 : i32
    %83 = tpu.memref_slice %arg2[%82, %c0_i32_56] : memref<1000x128xf32, #tpu.memory_space<any>> -> memref<1x128xf32, #tpu.memory_space<any>>
    %c11_i32_57 = arith.constant 11 : i32
    %c0_i32_58 = arith.constant 0 : i32
    %84 = tpu.memref_slice %arg4[%c11_i32_57, %c0_i32_58] : memref<16x128xf32, #tpu.memory_space<vmem>> -> memref<1x128xf32, #tpu.memory_space<vmem>>
    tpu.enqueue_dma source(%83 : memref<1x128xf32, #tpu.memory_space<any>>) target(%84 : memref<1x128xf32, #tpu.memory_space<vmem>>) target_semaphore(%arg5 : memref<!tpu.dma_semaphore, #tpu.memory_space<semaphore_mem>>)
    %c12_i32 = arith.constant 12 : i32
    %85 = arith.addi %0, %c12_i32 : i32
    %86 = arith.index_cast %85 : i32 to index
    %87 = memref.load %arg1[%86] : memref<16xi32, #tpu.memory_space<smem>>
    %c0_i32_59 = arith.constant 0 : i32
    %88 = arith.maxsi %87, %c0_i32_59 : i32
    %c999_i32_60 = arith.constant 999 : i32
    %89 = arith.minsi %88, %c999_i32_60 : i32
    %c0_i32_61 = arith.constant 0 : i32
    %90 = tpu.memref_slice %arg2[%89, %c0_i32_61] : memref<1000x128xf32, #tpu.memory_space<any>> -> memref<1x128xf32, #tpu.memory_space<any>>
    %c12_i32_62 = arith.constant 12 : i32
    %c0_i32_63 = arith.constant 0 : i32
    %91 = tpu.memref_slice %arg4[%c12_i32_62, %c0_i32_63] : memref<16x128xf32, #tpu.memory_space<vmem>> -> memref<1x128xf32, #tpu.memory_space<vmem>>
    tpu.enqueue_dma source(%90 : memref<1x128xf32, #tpu.memory_space<any>>) target(%91 : memref<1x128xf32, #tpu.memory_space<vmem>>) target_semaphore(%arg5 : memref<!tpu.dma_semaphore, #tpu.memory_space<semaphore_mem>>)
    %c13_i32 = arith.constant 13 : i32
    %92 = arith.addi %0, %c13_i32 : i32
    %93 = arith.index_cast %92 : i32 to index
    %94 = memref.load %arg1[%93] : memref<16xi32, #tpu.memory_space<smem>>
    %c0_i32_64 = arith.constant 0 : i32
    %95 = arith.maxsi %94, %c0_i32_64 : i32
    %c999_i32_65 = arith.constant 999 : i32
    %96 = arith.minsi %95, %c999_i32_65 : i32
    %c0_i32_66 = arith.constant 0 : i32
    %97 = tpu.memref_slice %arg2[%96, %c0_i32_66] : memref<1000x128xf32, #tpu.memory_space<any>> -> memref<1x128xf32, #tpu.memory_space<any>>
    %c13_i32_67 = arith.constant 13 : i32
    %c0_i32_68 = arith.constant 0 : i32
    %98 = tpu.memref_slice %arg4[%c13_i32_67, %c0_i32_68] : memref<16x128xf32, #tpu.memory_space<vmem>> -> memref<1x128xf32, #tpu.memory_space<vmem>>
    tpu.enqueue_dma source(%97 : memref<1x128xf32, #tpu.memory_space<any>>) target(%98 : memref<1x128xf32, #tpu.memory_space<vmem>>) target_semaphore(%arg5 : memref<!tpu.dma_semaphore, #tpu.memory_space<semaphore_mem>>)
    %c14_i32 = arith.constant 14 : i32
    %99 = arith.addi %0, %c14_i32 : i32
    %100 = arith.index_cast %99 : i32 to index
    %101 = memref.load %arg1[%100] : memref<16xi32, #tpu.memory_space<smem>>
    %c0_i32_69 = arith.constant 0 : i32
    %102 = arith.maxsi %101, %c0_i32_69 : i32
    %c999_i32_70 = arith.constant 999 : i32
    %103 = arith.minsi %102, %c999_i32_70 : i32
    %c0_i32_71 = arith.constant 0 : i32
    %104 = tpu.memref_slice %arg2[%103, %c0_i32_71] : memref<1000x128xf32, #tpu.memory_space<any>> -> memref<1x128xf32, #tpu.memory_space<any>>
    %c14_i32_72 = arith.constant 14 : i32
    %c0_i32_73 = arith.constant 0 : i32
    %105 = tpu.memref_slice %arg4[%c14_i32_72, %c0_i32_73] : memref<16x128xf32, #tpu.memory_space<vmem>> -> memref<1x128xf32, #tpu.memory_space<vmem>>
    tpu.enqueue_dma source(%104 : memref<1x128xf32, #tpu.memory_space<any>>) target(%105 : memref<1x128xf32, #tpu.memory_space<vmem>>) target_semaphore(%arg5 : memref<!tpu.dma_semaphore, #tpu.memory_space<semaphore_mem>>)
    %c15_i32 = arith.constant 15 : i32
    %106 = arith.addi %0, %c15_i32 : i32
    %107 = arith.index_cast %106 : i32 to index
    %108 = memref.load %arg1[%107] : memref<16xi32, #tpu.memory_space<smem>>
    %c0_i32_74 = arith.constant 0 : i32
    %109 = arith.maxsi %108, %c0_i32_74 : i32
    %c999_i32_75 = arith.constant 999 : i32
    %110 = arith.minsi %109, %c999_i32_75 : i32
    %c0_i32_76 = arith.constant 0 : i32
    %111 = tpu.memref_slice %arg2[%110, %c0_i32_76] : memref<1000x128xf32, #tpu.memory_space<any>> -> memref<1x128xf32, #tpu.memory_space<any>>
    %c15_i32_77 = arith.constant 15 : i32
    %c0_i32_78 = arith.constant 0 : i32
    %112 = tpu.memref_slice %arg4[%c15_i32_77, %c0_i32_78] : memref<16x128xf32, #tpu.memory_space<vmem>> -> memref<1x128xf32, #tpu.memory_space<vmem>>
    tpu.enqueue_dma source(%111 : memref<1x128xf32, #tpu.memory_space<any>>) target(%112 : memref<1x128xf32, #tpu.memory_space<vmem>>) target_semaphore(%arg5 : memref<!tpu.dma_semaphore, #tpu.memory_space<semaphore_mem>>)
    %c0_i32_79 = arith.constant 0 : i32
    %113 = tpu.memref_slice %arg2[%5, %c0_i32_79] : memref<1000x128xf32, #tpu.memory_space<any>> -> memref<1x128xf32, #tpu.memory_space<any>>
    %c0_i32_80 = arith.constant 0 : i32
    %c0_i32_81 = arith.constant 0 : i32
    %114 = tpu.memref_slice %arg4[%c0_i32_80, %c0_i32_81] : memref<16x128xf32, #tpu.memory_space<vmem>> -> memref<1x128xf32, #tpu.memory_space<vmem>>
    tpu.wait_dma2 semaphore(%arg5 : memref<!tpu.dma_semaphore, #tpu.memory_space<semaphore_mem>>) src(%113 : memref<1x128xf32, #tpu.memory_space<any>>) dst(%114 : memref<1x128xf32, #tpu.memory_space<vmem>>)
    %c0_i32_82 = arith.constant 0 : i32
    %115 = tpu.memref_slice %arg2[%12, %c0_i32_82] : memref<1000x128xf32, #tpu.memory_space<any>> -> memref<1x128xf32, #tpu.memory_space<any>>
    %c1_i32_83 = arith.constant 1 : i32
    %c0_i32_84 = arith.constant 0 : i32
    %116 = tpu.memref_slice %arg4[%c1_i32_83, %c0_i32_84] : memref<16x128xf32, #tpu.memory_space<vmem>> -> memref<1x128xf32, #tpu.memory_space<vmem>>
    tpu.wait_dma2 semaphore(%arg5 : memref<!tpu.dma_semaphore, #tpu.memory_space<semaphore_mem>>) src(%115 : memref<1x128xf32, #tpu.memory_space<any>>) dst(%116 : memref<1x128xf32, #tpu.memory_space<vmem>>)
    %c0_i32_85 = arith.constant 0 : i32
    %117 = tpu.memref_slice %arg2[%19, %c0_i32_85] : memref<1000x128xf32, #tpu.memory_space<any>> -> memref<1x128xf32, #tpu.memory_space<any>>
    %c2_i32_86 = arith.constant 2 : i32
    %c0_i32_87 = arith.constant 0 : i32
    %118 = tpu.memref_slice %arg4[%c2_i32_86, %c0_i32_87] : memref<16x128xf32, #tpu.memory_space<vmem>> -> memref<1x128xf32, #tpu.memory_space<vmem>>
    tpu.wait_dma2 semaphore(%arg5 : memref<!tpu.dma_semaphore, #tpu.memory_space<semaphore_mem>>) src(%117 : memref<1x128xf32, #tpu.memory_space<any>>) dst(%118 : memref<1x128xf32, #tpu.memory_space<vmem>>)
    %c0_i32_88 = arith.constant 0 : i32
    %119 = tpu.memref_slice %arg2[%26, %c0_i32_88] : memref<1000x128xf32, #tpu.memory_space<any>> -> memref<1x128xf32, #tpu.memory_space<any>>
    %c3_i32_89 = arith.constant 3 : i32
    %c0_i32_90 = arith.constant 0 : i32
    %120 = tpu.memref_slice %arg4[%c3_i32_89, %c0_i32_90] : memref<16x128xf32, #tpu.memory_space<vmem>> -> memref<1x128xf32, #tpu.memory_space<vmem>>
    tpu.wait_dma2 semaphore(%arg5 : memref<!tpu.dma_semaphore, #tpu.memory_space<semaphore_mem>>) src(%119 : memref<1x128xf32, #tpu.memory_space<any>>) dst(%120 : memref<1x128xf32, #tpu.memory_space<vmem>>)
    %c0_i32_91 = arith.constant 0 : i32
    %121 = tpu.memref_slice %arg2[%33, %c0_i32_91] : memref<1000x128xf32, #tpu.memory_space<any>> -> memref<1x128xf32, #tpu.memory_space<any>>
    %c4_i32_92 = arith.constant 4 : i32
    %c0_i32_93 = arith.constant 0 : i32
    %122 = tpu.memref_slice %arg4[%c4_i32_92, %c0_i32_93] : memref<16x128xf32, #tpu.memory_space<vmem>> -> memref<1x128xf32, #tpu.memory_space<vmem>>
    tpu.wait_dma2 semaphore(%arg5 : memref<!tpu.dma_semaphore, #tpu.memory_space<semaphore_mem>>) src(%121 : memref<1x128xf32, #tpu.memory_space<any>>) dst(%122 : memref<1x128xf32, #tpu.memory_space<vmem>>)
    %c0_i32_94 = arith.constant 0 : i32
    %123 = tpu.memref_slice %arg2[%40, %c0_i32_94] : memref<1000x128xf32, #tpu.memory_space<any>> -> memref<1x128xf32, #tpu.memory_space<any>>
    %c5_i32_95 = arith.constant 5 : i32
    %c0_i32_96 = arith.constant 0 : i32
    %124 = tpu.memref_slice %arg4[%c5_i32_95, %c0_i32_96] : memref<16x128xf32, #tpu.memory_space<vmem>> -> memref<1x128xf32, #tpu.memory_space<vmem>>
    tpu.wait_dma2 semaphore(%arg5 : memref<!tpu.dma_semaphore, #tpu.memory_space<semaphore_mem>>) src(%123 : memref<1x128xf32, #tpu.memory_space<any>>) dst(%124 : memref<1x128xf32, #tpu.memory_space<vmem>>)
    %c0_i32_97 = arith.constant 0 : i32
    %125 = tpu.memref_slice %arg2[%47, %c0_i32_97] : memref<1000x128xf32, #tpu.memory_space<any>> -> memref<1x128xf32, #tpu.memory_space<any>>
    %c6_i32_98 = arith.constant 6 : i32
    %c0_i32_99 = arith.constant 0 : i32
    %126 = tpu.memref_slice %arg4[%c6_i32_98, %c0_i32_99] : memref<16x128xf32, #tpu.memory_space<vmem>> -> memref<1x128xf32, #tpu.memory_space<vmem>>
    tpu.wait_dma2 semaphore(%arg5 : memref<!tpu.dma_semaphore, #tpu.memory_space<semaphore_mem>>) src(%125 : memref<1x128xf32, #tpu.memory_space<any>>) dst(%126 : memref<1x128xf32, #tpu.memory_space<vmem>>)
    %c0_i32_100 = arith.constant 0 : i32
    %127 = tpu.memref_slice %arg2[%54, %c0_i32_100] : memref<1000x128xf32, #tpu.memory_space<any>> -> memref<1x128xf32, #tpu.memory_space<any>>
    %c7_i32_101 = arith.constant 7 : i32
    %c0_i32_102 = arith.constant 0 : i32
    %128 = tpu.memref_slice %arg4[%c7_i32_101, %c0_i32_102] : memref<16x128xf32, #tpu.memory_space<vmem>> -> memref<1x128xf32, #tpu.memory_space<vmem>>
    tpu.wait_dma2 semaphore(%arg5 : memref<!tpu.dma_semaphore, #tpu.memory_space<semaphore_mem>>) src(%127 : memref<1x128xf32, #tpu.memory_space<any>>) dst(%128 : memref<1x128xf32, #tpu.memory_space<vmem>>)
    %c0_i32_103 = arith.constant 0 : i32
    %129 = tpu.memref_slice %arg2[%61, %c0_i32_103] : memref<1000x128xf32, #tpu.memory_space<any>> -> memref<1x128xf32, #tpu.memory_space<any>>
    %c8_i32_104 = arith.constant 8 : i32
    %c0_i32_105 = arith.constant 0 : i32
    %130 = tpu.memref_slice %arg4[%c8_i32_104, %c0_i32_105] : memref<16x128xf32, #tpu.memory_space<vmem>> -> memref<1x128xf32, #tpu.memory_space<vmem>>
    tpu.wait_dma2 semaphore(%arg5 : memref<!tpu.dma_semaphore, #tpu.memory_space<semaphore_mem>>) src(%129 : memref<1x128xf32, #tpu.memory_space<any>>) dst(%130 : memref<1x128xf32, #tpu.memory_space<vmem>>)
    %c0_i32_106 = arith.constant 0 : i32
    %131 = tpu.memref_slice %arg2[%68, %c0_i32_106] : memref<1000x128xf32, #tpu.memory_space<any>> -> memref<1x128xf32, #tpu.memory_space<any>>
    %c9_i32_107 = arith.constant 9 : i32
    %c0_i32_108 = arith.constant 0 : i32
    %132 = tpu.memref_slice %arg4[%c9_i32_107, %c0_i32_108] : memref<16x128xf32, #tpu.memory_space<vmem>> -> memref<1x128xf32, #tpu.memory_space<vmem>>
    tpu.wait_dma2 semaphore(%arg5 : memref<!tpu.dma_semaphore, #tpu.memory_space<semaphore_mem>>) src(%131 : memref<1x128xf32, #tpu.memory_space<any>>) dst(%132 : memref<1x128xf32, #tpu.memory_space<vmem>>)
    %c0_i32_109 = arith.constant 0 : i32
    %133 = tpu.memref_slice %arg2[%75, %c0_i32_109] : memref<1000x128xf32, #tpu.memory_space<any>> -> memref<1x128xf32, #tpu.memory_space<any>>
    %c10_i32_110 = arith.constant 10 : i32
    %c0_i32_111 = arith.constant 0 : i32
    %134 = tpu.memref_slice %arg4[%c10_i32_110, %c0_i32_111] : memref<16x128xf32, #tpu.memory_space<vmem>> -> memref<1x128xf32, #tpu.memory_space<vmem>>
    tpu.wait_dma2 semaphore(%arg5 : memref<!tpu.dma_semaphore, #tpu.memory_space<semaphore_mem>>) src(%133 : memref<1x128xf32, #tpu.memory_space<any>>) dst(%134 : memref<1x128xf32, #tpu.memory_space<vmem>>)
    %c0_i32_112 = arith.constant 0 : i32
    %135 = tpu.memref_slice %arg2[%82, %c0_i32_112] : memref<1000x128xf32, #tpu.memory_space<any>> -> memref<1x128xf32, #tpu.memory_space<any>>
    %c11_i32_113 = arith.constant 11 : i32
    %c0_i32_114 = arith.constant 0 : i32
    %136 = tpu.memref_slice %arg4[%c11_i32_113, %c0_i32_114] : memref<16x128xf32, #tpu.memory_space<vmem>> -> memref<1x128xf32, #tpu.memory_space<vmem>>
    tpu.wait_dma2 semaphore(%arg5 : memref<!tpu.dma_semaphore, #tpu.memory_space<semaphore_mem>>) src(%135 : memref<1x128xf32, #tpu.memory_space<any>>) dst(%136 : memref<1x128xf32, #tpu.memory_space<vmem>>)
    %c0_i32_115 = arith.constant 0 : i32
    %137 = tpu.memref_slice %arg2[%89, %c0_i32_115] : memref<1000x128xf32, #tpu.memory_space<any>> -> memref<1x128xf32, #tpu.memory_space<any>>
    %c12_i32_116 = arith.constant 12 : i32
    %c0_i32_117 = arith.constant 0 : i32
    %138 = tpu.memref_slice %arg4[%c12_i32_116, %c0_i32_117] : memref<16x128xf32, #tpu.memory_space<vmem>> -> memref<1x128xf32, #tpu.memory_space<vmem>>
    tpu.wait_dma2 semaphore(%arg5 : memref<!tpu.dma_semaphore, #tpu.memory_space<semaphore_mem>>) src(%137 : memref<1x128xf32, #tpu.memory_space<any>>) dst(%138 : memref<1x128xf32, #tpu.memory_space<vmem>>)
    %c0_i32_118 = arith.constant 0 : i32
    %139 = tpu.memref_slice %arg2[%96, %c0_i32_118] : memref<1000x128xf32, #tpu.memory_space<any>> -> memref<1x128xf32, #tpu.memory_space<any>>
    %c13_i32_119 = arith.constant 13 : i32
    %c0_i32_120 = arith.constant 0 : i32
    %140 = tpu.memref_slice %arg4[%c13_i32_119, %c0_i32_120] : memref<16x128xf32, #tpu.memory_space<vmem>> -> memref<1x128xf32, #tpu.memory_space<vmem>>
    tpu.wait_dma2 semaphore(%arg5 : memref<!tpu.dma_semaphore, #tpu.memory_space<semaphore_mem>>) src(%139 : memref<1x128xf32, #tpu.memory_space<any>>) dst(%140 : memref<1x128xf32, #tpu.memory_space<vmem>>)
    %c0_i32_121 = arith.constant 0 : i32
    %141 = tpu.memref_slice %arg2[%103, %c0_i32_121] : memref<1000x128xf32, #tpu.memory_space<any>> -> memref<1x128xf32, #tpu.memory_space<any>>
    %c14_i32_122 = arith.constant 14 : i32
    %c0_i32_123 = arith.constant 0 : i32
    %142 = tpu.memref_slice %arg4[%c14_i32_122, %c0_i32_123] : memref<16x128xf32, #tpu.memory_space<vmem>> -> memref<1x128xf32, #tpu.memory_space<vmem>>
    tpu.wait_dma2 semaphore(%arg5 : memref<!tpu.dma_semaphore, #tpu.memory_space<semaphore_mem>>) src(%141 : memref<1x128xf32, #tpu.memory_space<any>>) dst(%142 : memref<1x128xf32, #tpu.memory_space<vmem>>)
    %c0_i32_124 = arith.constant 0 : i32
    %143 = tpu.memref_slice %arg2[%110, %c0_i32_124] : memref<1000x128xf32, #tpu.memory_space<any>> -> memref<1x128xf32, #tpu.memory_space<any>>
    %c15_i32_125 = arith.constant 15 : i32
    %c0_i32_126 = arith.constant 0 : i32
    %144 = tpu.memref_slice %arg4[%c15_i32_125, %c0_i32_126] : memref<16x128xf32, #tpu.memory_space<vmem>> -> memref<1x128xf32, #tpu.memory_space<vmem>>
    tpu.wait_dma2 semaphore(%arg5 : memref<!tpu.dma_semaphore, #tpu.memory_space<semaphore_mem>>) src(%143 : memref<1x128xf32, #tpu.memory_space<any>>) dst(%144 : memref<1x128xf32, #tpu.memory_space<vmem>>)
    %c0 = arith.constant 0 : index
    %c0_127 = arith.constant 0 : index
    %145 = vector.load %arg4[%c0, %c0_127] : memref<16x128xf32, #tpu.memory_space<vmem>>, vector<16x128xf32>
    %c0_128 = arith.constant 0 : index
    %c0_129 = arith.constant 0 : index
    %146 = vector.load %arg3[%c0_128, %c0_129] : memref<16x128xf32, #tpu.memory_space<vmem>>, vector<16x128xf32>
    tpu.vector_store %arg3[%c0_128, %c0_129], %145 {strides = array<i32>} : memref<16x128xf32, #tpu.memory_space<vmem>>, vector<16x128xf32>,
    return
  }
  func.func @transform_1(%arg0: i32, %arg1: memref<16xi32, #tpu.memory_space<smem>>) -> (i32, i32) {
    %c0_i32 = arith.constant 0 : i32
    %c0_i32_0 = arith.constant 0 : i32
    return %arg0, %c0_i32 : i32, i32
  }
}

</mosaic_0001>

<llo_original>
// kernel: tpu_custom_call.1
$region0: #{tpu_custom_call.1}
  #allocation0 [shape = 'u32[]', space=smem, size = 0x4, offset = 0x4, fixed_abs, tag = 'smem constant byte address 0x4 - core index']
  #allocation1 [shape = 'u32[144,128]{1,0:T(1,128)}', space=vmem, size = 0x12000, scoped, tag = 'internal scratch']
  #allocation2 [shape = 'f32[16,128]{1,0:T(8,128)}', space=vmem, size = 0x2000, scoped, tag = 'scratch operand']
  #allocation3 [shape = 's32[1]{0}', space=sflag, size = 0x4, scoped, tag = 'scratch operand']
  #allocation4 [shape = 's32[1]{0}', space=sflag, size = 0x4, scoped, tag = 'scoped memory for tpu_custom_call.1']
  #allocation5 [shape = 'u8[512]{0}', space=smem, size = 0x200, scoped, tag = 'prefetched SMEM operand 0']
  #allocation8 [shape = 's32[]', space=sflag, size = 0x4, offset = 0, fixed_abs, tag = 'sflag constant byte address 0x0 - dummy sync flag']
  #allocation9 [shape = 's32[]', space=sflag, size = 0x4, offset = 0, fixed_abs, tag = 'sflag constant byte address 0x0 - dummy sync flag']
  #allocation10 [shape = 'u32[]', space=smem, size = 0x4, offset = 0x44, fixed_abs, tag = 'smem constant byte address 0x44 - assertion arg 0']
  #allocation11 [shape = 'u32[]', space=smem, size = 0x4, offset = 0x48, fixed_abs, tag = 'smem constant byte address 0x48 - assertion arg 1']
  #allocation12 [shape = 's32[]', space=sflag, size = 0x4, offset = 0, fixed_abs, tag = 'sflag constant byte address 0x0 - dummy sync flag']
  #allocation13 [shape = 's32[]', space=sflag, size = 0x4, offset = 0, fixed_abs, tag = 'sflag constant byte address 0x0 - dummy sync flag']
  #allocation14 [shape = 's32[]', space=sflag, size = 0x4, offset = 0, fixed_abs, tag = 'sflag constant byte address 0x0 - dummy sync flag']
  #allocation15 [shape = 's32[]', space=sflag, size = 0x4, offset = 0, fixed_abs, tag = 'sflag constant byte address 0x0 - dummy sync flag']
  #allocation16 [shape = 's32[]', space=sflag, size = 0x4, offset = 0, fixed_abs, tag = 'sflag constant byte address 0x0 - dummy sync flag']
  #allocation17 [shape = 's32[]', space=sflag, size = 0x4, offset = 0, fixed_abs, tag = 'sflag constant byte address 0x0 - dummy sync flag']
  #allocation18 [shape = 's32[]', space=sflag, size = 0x4, offset = 0, fixed_abs, tag = 'sflag constant byte address 0x0 - dummy sync flag']
  #allocation19 [shape = 's32[]', space=sflag, size = 0x4, offset = 0, fixed_abs, tag = 'sflag constant byte address 0x0 - dummy sync flag']
  #allocation20 [shape = 's32[]', space=sflag, size = 0x4, offset = 0, fixed_abs, tag = 'sflag constant byte address 0x0 - dummy sync flag']
  #allocation21 [shape = 's32[]', space=sflag, size = 0x4, offset = 0, fixed_abs, tag = 'sflag constant byte address 0x0 - dummy sync flag']
  #allocation22 [shape = 's32[]', space=sflag, size = 0x4, offset = 0, fixed_abs, tag = 'sflag constant byte address 0x0 - dummy sync flag']
  #allocation23 [shape = 's32[]', space=sflag, size = 0x4, offset = 0, fixed_abs, tag = 'sflag constant byte address 0x0 - dummy sync flag']
  #allocation24 [shape = 's32[]', space=sflag, size = 0x4, offset = 0, fixed_abs, tag = 'sflag constant byte address 0x0 - dummy sync flag']
  #allocation25 [shape = 's32[]', space=sflag, size = 0x4, offset = 0, fixed_abs, tag = 'sflag constant byte address 0x0 - dummy sync flag']
  #allocation26 [shape = 's32[]', space=sflag, size = 0x4, offset = 0, fixed_abs, tag = 'sflag constant byte address 0x0 - dummy sync flag']
  #allocation27 [shape = 's32[]', space=sflag, size = 0x4, offset = 0, fixed_abs, tag = 'sflag constant byte address 0x0 - dummy sync flag']
  #allocation28 [shape = 's32[]', space=sflag, size = 0x4, offset = 0, fixed_abs, tag = 'sflag constant byte address 0x0 - dummy sync flag']
  #allocation29 [shape = 's32[]', space=sflag, size = 0x4, offset = 0, fixed_abs, tag = 'sflag constant byte address 0x0 - dummy sync flag']
  #allocation30 [shape = 's32[]', space=sflag, size = 0x4, offset = 0, fixed_abs, tag = 'sflag constant byte address 0x0 - dummy sync flag']
  #allocation31 [shape = 's32[]', space=sflag, size = 0x4, offset = 0, fixed_abs, tag = 'sflag constant byte address 0x0 - dummy sync flag']
  #allocation32 [shape = 's32[]', space=sflag, size = 0x4, offset = 0, fixed_abs, tag = 'sflag constant byte address 0x0 - dummy sync flag']
  #allocation33 [shape = 's32[]', space=sflag, size = 0x4, offset = 0, fixed_abs, tag = 'sflag constant byte address 0x0 - dummy sync flag']
  #allocation34 [shape = 's32[]', space=sflag, size = 0x4, offset = 0, fixed_abs, tag = 'sflag constant byte address 0x0 - dummy sync flag']
  #allocation35 [shape = 's32[]', space=sflag, size = 0x4, offset = 0, fixed_abs, tag = 'sflag constant byte address 0x0 - dummy sync flag']
  #allocation36 [shape = 's32[]', space=sflag, size = 0x4, offset = 0, fixed_abs, tag = 'sflag constant byte address 0x0 - dummy sync flag']
  #allocation37 [shape = 's32[]', space=sflag, size = 0x4, offset = 0, fixed_abs, tag = 'sflag constant byte address 0x0 - dummy sync flag']
  #allocation38 [shape = 's32[]', space=sflag, size = 0x4, offset = 0, fixed_abs, tag = 'sflag constant byte address 0x0 - dummy sync flag']
  #allocation39 [shape = 's32[]', space=sflag, size = 0x4, offset = 0, fixed_abs, tag = 'sflag constant byte address 0x0 - dummy sync flag']
  #allocation40 [shape = 's32[]', space=sflag, size = 0x4, offset = 0, fixed_abs, tag = 'sflag constant byte address 0x0 - dummy sync flag']
  #allocation41 [shape = 's32[]', space=sflag, size = 0x4, offset = 0, fixed_abs, tag = 'sflag constant byte address 0x0 - dummy sync flag']
  %s0 = inlined_call_operand.hbm [shape: s32[16], index: 0, kind: input, shape index: {}]
  %s1 = inlined_call_operand.hbm [shape: f32[1000,128], index: 1, kind: input, shape index: {}]
  %s2 = inlined_call_operand.hbm [shape: f32[16,128], index: 2, kind: output, shape index: {}]
  %s3 = sld [smem:[#allocation0]]
  $region74: #{tpu_custom_call.1} parent=0
    _
  %s5 = ssub.s32 1, %s3
  %s6 = scalar_select 0, %s5, %s3
  %8 = dma.hbm_to_smem %s0, 16, [#allocation5], [#allocation4]
  %9 = dma.done [#allocation4], 16
  %10 = sfence
  $region1: #{tpu_custom_call.1} parent=0
    #allocation6 [shape = 'u8[8192]{0}', space=vmem, size = 0x2000, scoped, tag = 'output window, operand 0, single buffered']
    #allocation7 [shape = 's32[1]{0}', space=sflag, size = 0x4, scoped, tag = 'scoped memory for tpu_custom_call.1']
    %11 = vsyncpa [#allocation7], 0
    %s12 = smul.u32 0, 16
    %s13 = sld [smem:[#allocation5 + %s12]]
    %p14 = scmp.gt.s32.totalorder %s13, 0
    %s15 = scalar_select %p14, %s13, 0
    %p16 = scmp.lt.s32.totalorder %s15, 999
    %s17 = scalar_select %p16, %s15, 999
    %s18 = smul.addr %s17, 16
    %s19 = scalar_lea.hbm %s1, %s18
    // Predicated region
    $region2: #{tpu_custom_call.1} parent=1 // pred_check
      _
    $region3: #{tpu_custom_call.1} parent=1 // pred_check_branch
      %21 = sbr.rel target = $region5
    $region4: #{tpu_custom_call.1} parent=1 // pred_region
      %22 = sst [smem:[#allocation10]] [#allocation9]
      %23 = sst [smem:[#allocation11]] [#allocation8]
    $region5: #{tpu_custom_call.1} parent=1 // pred_fallthru
      _
    %25 = shalt.err (0)
    %s27 = sshll.u32 [#allocation2], 4
    %s28 = int_to_ptr.vmem [resolvable:$true] %s27
    %30 = dma.hbm_to_vmem [thread:$0]  %s19, 16, %s28, [#allocation3]
    %s31 = sadd.s32 %s12, 1
    %s32 = sld [smem:[#allocation5 + %s31]]
    %p33 = scmp.gt.s32.totalorder %s32, 0
    %s34 = scalar_select %p33, %s32, 0
    %p35 = scmp.lt.s32.totalorder %s34, 999
    %s36 = scalar_select %p35, %s34, 999
    %s37 = smul.addr %s36, 16
    %s38 = scalar_lea.hbm %s1, %s37
    %s39 = scalar_lea.vmem [#allocation2], 1
    // Predicated region
    $region6: #{tpu_custom_call.1} parent=1 // pred_check
      _
    $region7: #{tpu_custom_call.1} parent=1 // pred_check_branch
      %41 = sbr.rel target = $region9
    $region8: #{tpu_custom_call.1} parent=1 // pred_region
      %42 = sst [smem:[#allocation10]] [#allocation13]
      %43 = sst [smem:[#allocation11]] [#allocation12]
    $region9: #{tpu_custom_call.1} parent=1 // pred_fallthru
      _
    %45 = shalt.err (0)
    %s47 = sshll.u32 %s39, 4
    %s48 = int_to_ptr.vmem [resolvable:$true] %s47
    %50 = dma.hbm_to_vmem [thread:$0]  %s38, 16, %s48, [#allocation3]
    %s51 = sadd.s32 %s12, 2
    %s52 = sld [smem:[#allocation5 + %s51]]
    %p53 = scmp.gt.s32.totalorder %s52, 0
    %s54 = scalar_select %p53, %s52, 0
    %p55 = scmp.lt.s32.totalorder %s54, 999
    %s56 = scalar_select %p55, %s54, 999
    %s57 = smul.addr %s56, 16
    %s58 = scalar_lea.hbm %s1, %s57
    %s59 = scalar_lea.vmem [#allocation2], 2
    // Predicated region
    $region10: #{tpu_custom_call.1} parent=1 // pred_check
      _
    $region11: #{tpu_custom_call.1} parent=1 // pred_check_branch
      %61 = sbr.rel target = $region13
    $region12: #{tpu_custom_call.1} parent=1 // pred_region
      %62 = sst [smem:[#allocation10]] [#allocation15]
      %63 = sst [smem:[#allocation11]] [#allocation14]
    $region13: #{tpu_custom_call.1} parent=1 // pred_fallthru
      _
    %65 = shalt.err (0)
    %s67 = sshll.u32 %s59, 4
    %s68 = int_to_ptr.vmem [resolvable:$true] %s67
    %70 = dma.hbm_to_vmem [thread:$0]  %s58, 16, %s68, [#allocation3]
    %s71 = sadd.s32 %s12, 3
    %s72 = sld [smem:[#allocation5 + %s71]]
    %p73 = scmp.gt.s32.totalorder %s72, 0
    %s74 = scalar_select %p73, %s72, 0
    %p75 = scmp.lt.s32.totalorder %s74, 999
    %s76 = scalar_select %p75, %s74, 999
    %s77 = smul.addr %s76, 16
    %s78 = scalar_lea.hbm %s1, %s77
    %s79 = scalar_lea.vmem [#allocation2], 3
    // Predicated region
    $region14: #{tpu_custom_call.1} parent=1 // pred_check
      _
    $region15: #{tpu_custom_call.1} parent=1 // pred_check_branch
      %81 = sbr.rel target = $region17
    $region16: #{tpu_custom_call.1} parent=1 // pred_region
      %82 = sst [smem:[#allocation10]] [#allocation17]
      %83 = sst [smem:[#allocation11]] [#allocation16]
    $region17: #{tpu_custom_call.1} parent=1 // pred_fallthru
      _
    %85 = shalt.err (0)
    %s87 = sshll.u32 %s79, 4
    %s88 = int_to_ptr.vmem [resolvable:$true] %s87
    %90 = dma.hbm_to_vmem [thread:$0]  %s78, 16, %s88, [#allocation3]
    %s91 = sadd.s32 %s12, 4
    %s92 = sld [smem:[#allocation5 + %s91]]
    %p93 = scmp.gt.s32.totalorder %s92, 0
    %s94 = scalar_select %p93, %s92, 0
    %p95 = scmp.lt.s32.totalorder %s94, 999
    %s96 = scalar_select %p95, %s94, 999
    %s97 = smul.addr %s96, 16
    %s98 = scalar_lea.hbm %s1, %s97
    %s99 = scalar_lea.vmem [#allocation2], 4
    // Predicated region
    $region18: #{tpu_custom_call.1} parent=1 // pred_check
      _
    $region19: #{tpu_custom_call.1} parent=1 // pred_check_branch
      %101 = sbr.rel target = $region21
    $region20: #{tpu_custom_call.1} parent=1 // pred_region
      %102 = sst [smem:[#allocation10]] [#allocation19]
      %103 = sst [smem:[#allocation11]] [#allocation18]
    $region21: #{tpu_custom_call.1} parent=1 // pred_fallthru
      _
    %105 = shalt.err (0)
    %s107 = sshll.u32 %s99, 4
    %s108 = int_to_ptr.vmem [resolvable:$true] %s107
    %110 = dma.hbm_to_vmem [thread:$0]  %s98, 16, %s108, [#allocation3]
    %s111 = sadd.s32 %s12, 5
    %s112 = sld [smem:[#allocation5 + %s111]]
    %p113 = scmp.gt.s32.totalorder %s112, 0
    %s114 = scalar_select %p113, %s112, 0
    %p115 = scmp.lt.s32.totalorder %s114, 999
    %s116 = scalar_select %p115, %s114, 999
    %s117 = smul.addr %s116, 16
    %s118 = scalar_lea.hbm %s1, %s117
    %s119 = scalar_lea.vmem [#allocation2], 5
    // Predicated region
    $region22: #{tpu_custom_call.1} parent=1 // pred_check
      _
    $region23: #{tpu_custom_call.1} parent=1 // pred_check_branch
      %121 = sbr.rel target = $region25
    $region24: #{tpu_custom_call.1} parent=1 // pred_region
      %122 = sst [smem:[#allocation10]] [#allocation21]
      %123 = sst [smem:[#allocation11]] [#allocation20]
    $region25: #{tpu_custom_call.1} parent=1 // pred_fallthru
      _
    %125 = shalt.err (0)
    %s127 = sshll.u32 %s119, 4
    %s128 = int_to_ptr.vmem [resolvable:$true] %s127
    %130 = dma.hbm_to_vmem [thread:$0]  %s118, 16, %s128, [#allocation3]
    %s131 = sadd.s32 %s12, 6
    %s132 = sld [smem:[#allocation5 + %s131]]
    %p133 = scmp.gt.s32.totalorder %s132, 0
    %s134 = scalar_select %p133, %s132, 0
    %p135 = scmp.lt.s32.totalorder %s134, 999
    %s136 = scalar_select %p135, %s134, 999
    %s137 = smul.addr %s136, 16
    %s138 = scalar_lea.hbm %s1, %s137
    %s139 = scalar_lea.vmem [#allocation2], 6
    // Predicated region
    $region26: #{tpu_custom_call.1} parent=1 // pred_check
      _
    $region27: #{tpu_custom_call.1} parent=1 // pred_check_branch
      %141 = sbr.rel target = $region29
    $region28: #{tpu_custom_call.1} parent=1 // pred_region
      %142 = sst [smem:[#allocation10]] [#allocation23]
      %143 = sst [smem:[#allocation11]] [#allocation22]
    $region29: #{tpu_custom_call.1} parent=1 // pred_fallthru
      _
    %145 = shalt.err (0)
    %s147 = sshll.u32 %s139, 4
    %s148 = int_to_ptr.vmem [resolvable:$true] %s147
    %150 = dma.hbm_to_vmem [thread:$0]  %s138, 16, %s148, [#allocation3]
    %s151 = sadd.s32 %s12, 7
    %s152 = sld [smem:[#allocation5 + %s151]]
    %p153 = scmp.gt.s32.totalorder %s152, 0
    %s154 = scalar_select %p153, %s152, 0
    %p155 = scmp.lt.s32.totalorder %s154, 999
    %s156 = scalar_select %p155, %s154, 999
    %s157 = smul.addr %s156, 16
    %s158 = scalar_lea.hbm %s1, %s157
    %s159 = scalar_lea.vmem [#allocation2], 7
    // Predicated region
    $region30: #{tpu_custom_call.1} parent=1 // pred_check
      _
    $region31: #{tpu_custom_call.1} parent=1 // pred_check_branch
      %161 = sbr.rel target = $region33
    $region32: #{tpu_custom_call.1} parent=1 // pred_region
      %162 = sst [smem:[#allocation10]] [#allocation25]
      %163 = sst [smem:[#allocation11]] [#allocation24]
    $region33: #{tpu_custom_call.1} parent=1 // pred_fallthru
      _
    %165 = shalt.err (0)
    %s167 = sshll.u32 %s159, 4
    %s168 = int_to_ptr.vmem [resolvable:$true] %s167
    %170 = dma.hbm_to_vmem [thread:$0]  %s158, 16, %s168, [#allocation3]
    %s171 = sadd.s32 %s12, 8
    %s172 = sld [smem:[#allocation5 + %s171]]
    %p173 = scmp.gt.s32.totalorder %s172, 0
    %s174 = scalar_select %p173, %s172, 0
    %p175 = scmp.lt.s32.totalorder %s174, 999
    %s176 = scalar_select %p175, %s174, 999
    %s177 = smul.addr %s176, 16
    %s178 = scalar_lea.hbm %s1, %s177
    %s179 = scalar_lea.vmem [#allocation2], 8
    // Predicated region
    $region34: #{tpu_custom_call.1} parent=1 // pred_check
      _
    $region35: #{tpu_custom_call.1} parent=1 // pred_check_branch
      %181 = sbr.rel target = $region37
    $region36: #{tpu_custom_call.1} parent=1 // pred_region
      %182 = sst [smem:[#allocation10]] [#allocation27]
      %183 = sst [smem:[#allocation11]] [#allocation26]
    $region37: #{tpu_custom_call.1} parent=1 // pred_fallthru
      _
    %185 = shalt.err (0)
    %s187 = sshll.u32 %s179, 4
    %s188 = int_to_ptr.vmem [resolvable:$true] %s187
    %190 = dma.hbm_to_vmem [thread:$0]  %s178, 16, %s188, [#allocation3]
    %s191 = sadd.s32 %s12, 9
    %s192 = sld [smem:[#allocation5 + %s191]]
    %p193 = scmp.gt.s32.totalorder %s192, 0
    %s194 = scalar_select %p193, %s192, 0
    %p195 = scmp.lt.s32.totalorder %s194, 999
    %s196 = scalar_select %p195, %s194, 999
    %s197 = smul.addr %s196, 16
    %s198 = scalar_lea.hbm %s1, %s197
    %s199 = scalar_lea.vmem [#allocation2], 9
    // Predicated region
    $region38: #{tpu_custom_call.1} parent=1 // pred_check
      _
    $region39: #{tpu_custom_call.1} parent=1 // pred_check_branch
      %201 = sbr.rel target = $region41
    $region40: #{tpu_custom_call.1} parent=1 // pred_region
      %202 = sst [smem:[#allocation10]] [#allocation29]
      %203 = sst [smem:[#allocation11]] [#allocation28]
    $region41: #{tpu_custom_call.1} parent=1 // pred_fallthru
      _
    %205 = shalt.err (0)
    %s207 = sshll.u32 %s199, 4
    %s208 = int_to_ptr.vmem [resolvable:$true] %s207
    %210 = dma.hbm_to_vmem [thread:$0]  %s198, 16, %s208, [#allocation3]
    %s211 = sadd.s32 %s12, 10
    %s212 = sld [smem:[#allocation5 + %s211]]
    %p213 = scmp.gt.s32.totalorder %s212, 0
    %s214 = scalar_select %p213, %s212, 0
    %p215 = scmp.lt.s32.totalorder %s214, 999
    %s216 = scalar_select %p215, %s214, 999
    %s217 = smul.addr %s216, 16
    %s218 = scalar_lea.hbm %s1, %s217
    %s219 = scalar_lea.vmem [#allocation2], 10
    // Predicated region
    $region42: #{tpu_custom_call.1} parent=1 // pred_check
      _
    $region43: #{tpu_custom_call.1} parent=1 // pred_check_branch
      %221 = sbr.rel target = $region45
    $region44: #{tpu_custom_call.1} parent=1 // pred_region
      %222 = sst [smem:[#allocation10]] [#allocation31]
      %223 = sst [smem:[#allocation11]] [#allocation30]
    $region45: #{tpu_custom_call.1} parent=1 // pred_fallthru
      _
    %225 = shalt.err (0)
    %s227 = sshll.u32 %s219, 4
    %s228 = int_to_ptr.vmem [resolvable:$true] %s227
    %230 = dma.hbm_to_vmem [thread:$0]  %s218, 16, %s228, [#allocation3]
    %s231 = sadd.s32 %s12, 11
    %s232 = sld [smem:[#allocation5 + %s231]]
    %p233 = scmp.gt.s32.totalorder %s232, 0
    %s234 = scalar_select %p233, %s232, 0
    %p235 = scmp.lt.s32.totalorder %s234, 999
    %s236 = scalar_select %p235, %s234, 999
    %s237 = smul.addr %s236, 16
    %s238 = scalar_lea.hbm %s1, %s237
    %s239 = scalar_lea.vmem [#allocation2], 11
    // Predicated region
    $region46: #{tpu_custom_call.1} parent=1 // pred_check
      _
    $region47: #{tpu_custom_call.1} parent=1 // pred_check_branch
      %241 = sbr.rel target = $region49
    $region48: #{tpu_custom_call.1} parent=1 // pred_region
      %242 = sst [smem:[#allocation10]] [#allocation33]
      %243 = sst [smem:[#allocation11]] [#allocation32]
    $region49: #{tpu_custom_call.1} parent=1 // pred_fallthru
      _
    %245 = shalt.err (0)
    %s247 = sshll.u32 %s239, 4
    %s248 = int_to_ptr.vmem [resolvable:$true] %s247
    %250 = dma.hbm_to_vmem [thread:$0]  %s238, 16, %s248, [#allocation3]
    %s251 = sadd.s32 %s12, 12
    %s252 = sld [smem:[#allocation5 + %s251]]
    %p253 = scmp.gt.s32.totalorder %s252, 0
    %s254 = scalar_select %p253, %s252, 0
    %p255 = scmp.lt.s32.totalorder %s254, 999
    %s256 = scalar_select %p255, %s254, 999
    %s257 = smul.addr %s256, 16
    %s258 = scalar_lea.hbm %s1, %s257
    %s259 = scalar_lea.vmem [#allocation2], 12
    // Predicated region
    $region50: #{tpu_custom_call.1} parent=1 // pred_check
      _
    $region51: #{tpu_custom_call.1} parent=1 // pred_check_branch
      %261 = sbr.rel target = $region53
    $region52: #{tpu_custom_call.1} parent=1 // pred_region
      %262 = sst [smem:[#allocation10]] [#allocation35]
      %263 = sst [smem:[#allocation11]] [#allocation34]
    $region53: #{tpu_custom_call.1} parent=1 // pred_fallthru
      _
    %265 = shalt.err (0)
    %s267 = sshll.u32 %s259, 4
    %s268 = int_to_ptr.vmem [resolvable:$true] %s267
    %270 = dma.hbm_to_vmem [thread:$0]  %s258, 16, %s268, [#allocation3]
    %s271 = sadd.s32 %s12, 13
    %s272 = sld [smem:[#allocation5 + %s271]]
    %p273 = scmp.gt.s32.totalorder %s272, 0
    %s274 = scalar_select %p273, %s272, 0
    %p275 = scmp.lt.s32.totalorder %s274, 999
    %s276 = scalar_select %p275, %s274, 999
    %s277 = smul.addr %s276, 16
    %s278 = scalar_lea.hbm %s1, %s277
    %s279 = scalar_lea.vmem [#allocation2], 13
    // Predicated region
    $region54: #{tpu_custom_call.1} parent=1 // pred_check
      _
    $region55: #{tpu_custom_call.1} parent=1 // pred_check_branch
      %281 = sbr.rel target = $region57
    $region56: #{tpu_custom_call.1} parent=1 // pred_region
      %282 = sst [smem:[#allocation10]] [#allocation37]
      %283 = sst [smem:[#allocation11]] [#allocation36]
    $region57: #{tpu_custom_call.1} parent=1 // pred_fallthru
      _
    %285 = shalt.err (0)
    %s287 = sshll.u32 %s279, 4
    %s288 = int_to_ptr.vmem [resolvable:$true] %s287
    %290 = dma.hbm_to_vmem [thread:$0]  %s278, 16, %s288, [#allocation3]
    %s291 = sadd.s32 %s12, 14
    %s292 = sld [smem:[#allocation5 + %s291]]
    %p293 = scmp.gt.s32.totalorder %s292, 0
    %s294 = scalar_select %p293, %s292, 0
    %p295 = scmp.lt.s32.totalorder %s294, 999
    %s296 = scalar_select %p295, %s294, 999
    %s297 = smul.addr %s296, 16
    %s298 = scalar_lea.hbm %s1, %s297
    %s299 = scalar_lea.vmem [#allocation2], 14
    // Predicated region
    $region58: #{tpu_custom_call.1} parent=1 // pred_check
      _
    $region59: #{tpu_custom_call.1} parent=1 // pred_check_branch
      %301 = sbr.rel target = $region61
    $region60: #{tpu_custom_call.1} parent=1 // pred_region
      %302 = sst [smem:[#allocation10]] [#allocation39]
      %303 = sst [smem:[#allocation11]] [#allocation38]
    $region61: #{tpu_custom_call.1} parent=1 // pred_fallthru
      _
    %305 = shalt.err (0)
    %s307 = sshll.u32 %s299, 4
    %s308 = int_to_ptr.vmem [resolvable:$true] %s307
    %310 = dma.hbm_to_vmem [thread:$0]  %s298, 16, %s308, [#allocation3]
    %s311 = sadd.s32 %s12, 15
    %s312 = sld [smem:[#allocation5 + %s311]]
    %p313 = scmp.gt.s32.totalorder %s312, 0
    %s314 = scalar_select %p313, %s312, 0
    %p315 = scmp.lt.s32.totalorder %s314, 999
    %s316 = scalar_select %p315, %s314, 999
    %s317 = smul.addr %s316, 16
    %s318 = scalar_lea.hbm %s1, %s317
    %s319 = scalar_lea.vmem [#allocation2], 15
    // Predicated region
    $region62: #{tpu_custom_call.1} parent=1 // pred_check
      _
    $region63: #{tpu_custom_call.1} parent=1 // pred_check_branch
      %321 = sbr.rel target = $region65
    $region64: #{tpu_custom_call.1} parent=1 // pred_region
      %322 = sst [smem:[#allocation10]] [#allocation41]
      %323 = sst [smem:[#allocation11]] [#allocation40]
    $region65: #{tpu_custom_call.1} parent=1 // pred_fallthru
      _
    %325 = shalt.err (0)
    %s327 = sshll.u32 %s319, 4
    %s328 = int_to_ptr.vmem [resolvable:$true] %s327
    %330 = dma.hbm_to_vmem [thread:$0]  %s318, 16, %s328, [#allocation3]
    %s331 = smul.u32 1, 1
    %s332 = sshll.u32 %s331, 4
    %333 = dma.done [#allocation3], %s332
    %s334 = sshll.u32 %s331, 4
    %335 = dma.done [#allocation3], %s334
    %s336 = sshll.u32 %s331, 4
    %337 = dma.done [#allocation3], %s336
    %s338 = sshll.u32 %s331, 4
    %339 = dma.done [#allocation3], %s338
    %s340 = sshll.u32 %s331, 4
    %341 = dma.done [#allocation3], %s340
    %s342 = sshll.u32 %s331, 4
    %343 = dma.done [#allocation3], %s342
    %s344 = sshll.u32 %s331, 4
    %345 = dma.done [#allocation3], %s344
    %s346 = sshll.u32 %s331, 4
    %347 = dma.done [#allocation3], %s346
    %s348 = sshll.u32 %s331, 4
    %349 = dma.done [#allocation3], %s348
    %s350 = sshll.u32 %s331, 4
    %351 = dma.done [#allocation3], %s350
    %s352 = sshll.u32 %s331, 4
    %353 = dma.done [#allocation3], %s352
    %s354 = sshll.u32 %s331, 4
    %355 = dma.done [#allocation3], %s354
    %s356 = sshll.u32 %s331, 4
    %357 = dma.done [#allocation3], %s356
    %s358 = sshll.u32 %s331, 4
    %359 = dma.done [#allocation3], %s358
    %s360 = sshll.u32 %s331, 4
    %361 = dma.done [#allocation3], %s360
    %s362 = sshll.u32 %s331, 4
    %363 = dma.done [#allocation3], %s362
    %v364 = vld [vmem:[#allocation2] sm:$0xff]
    %v365 = vld [vmem:[#allocation2 + $0x8] sm:$0xff]
    %366 = vst [vmem:[#allocation6] sm:$0xff] %v364
    %367 = vst [vmem:[#allocation6 + $0x8] sm:$0xff] %v365
    // Predicated region
    $region66: #{tpu_custom_call.1} parent=1 // pred_check
      _
    $region67: #{tpu_custom_call.1} parent=1 // pred_check_branch
      %369 = sbr.rel (0) target = $region69
    $region68: #{tpu_custom_call.1} parent=1 // pred_region
      %s371 = ssub.s32 256, 256
      %372 = vsyncadd [#allocation7], %s371
      %s373 = sshll.u32 [#allocation6], 4
      %s374 = int_to_ptr.vmem [resolvable:$true] %s373
      %379 = dma.vmem_to_hbm [thread:$0]  %s374, 256, %s2, [#allocation7], 128, 128, 8
    $region69: #{tpu_custom_call.1} parent=1 // pred_fallthru
      _
    // Predicated region
    $region70: #{tpu_custom_call.1} parent=1 // pred_check
      _
    $region71: #{tpu_custom_call.1} parent=1 // pred_check_branch
      %381 = sbr.rel (0) target = $region73
    $region72: #{tpu_custom_call.1} parent=1 // pred_region
      %382 = dma.done [#allocation7], 256
    $region73: #{tpu_custom_call.1} parent=1 // pred_fallthru
      _
    %383 = vsyncpa [#allocation7], 1
  %384 = vsyncmov [#allocation3]
  %s385 = vpop.sfrf %384
  %p386 = scmp.eq.s32.totalorder %s385, 0
  %p387 = pneg %p386
  %389 = shalt.err (%p387)

</llo_original>
